<compile_context>
chip_gen: v6e
topology: v6e:2x2x1
jax: 0.10.0
libtpu: 0.0.40
codegen_flags: <defaults>
</compile_context>

<pallas_src>
import jax
import jax.numpy as jnp
from jax.experimental import pallas as pl
from jax.experimental.pallas import tpu as pltpu


_LANE = 128          # lane width of a vreg
_F32_SUBLANE = 8     # sublane count of a vreg (f32)


def _round_up(n, m):
    return ((n + m - 1) // m) * m


def _sublane_pack(dtype):
    # f32 packs 8 rows per vreg, bf16 packs 16 (sub-32-bit packs along sublanes)
    return _F32_SUBLANE * (4 // jnp.dtype(dtype).itemsize)


def _detect_num_tensorcores():
    # Best-effort: single-TC parts (v5e/v6e) fall back to 1.
    try:
        n = getattr(jax.devices()[0], "num_cores", None)
        return int(n) if n else 1
    except Exception:
        return 1


# ----------------------------------------------------------------------------
# Fused MLP kernel: x -> [Linear + ReLU]* -> Linear, all inside one body.
# refs = (x_ref, w0_ref, ..., w_{L-1}_ref, bias_ref, o_ref)
#   x_ref    : (bm, Kin0_p)        compute dtype
#   w_i_ref  : (Kin_i_p, Kout_i_p) compute dtype, zero-padded
#   bias_ref : (L, max_Kout_p)     f32, all biases concatenated (one DMA)
#   o_ref    : (bm, out_dim)       f32, only the real output columns
# ----------------------------------------------------------------------------
def _fused_mlp_kernel(*refs):
    x_ref = refs[0]
    o_ref = refs[-1]
    b_ref = refs[-2]
    w_refs = refs[1:-2]
    n_layers = len(w_refs)

    h = x_ref[...]
    for li, w_ref in enumerate(w_refs):
        w = w_ref[...]
        kout_p = w.shape[1]
        b = b_ref[li, :kout_p]                       # (kout_p,) f32, lane aligned
        y = jnp.dot(h.astype(w.dtype), w,
                    preferred_element_type=jnp.float32) + b
        if li < n_layers - 1:                        # ReLU on hidden layers only
            y = jnp.maximum(y, 0.0)
        h = y
    # TODO(synk): nn.Dropout training-mode random masking/scaling is not
    # implemented; eval-mode dropout is the identity, which is what we apply.
    o_ref[...] = h[:, : o_ref.shape[-1]].astype(o_ref.dtype)


# ----------------------------------------------------------------------------
# Parameters: xavier-normal weights, zero biases (matches DNN._init_weight).
# ----------------------------------------------------------------------------
def init_dnn_params(key, hidden_units, output_dim, dtype=jnp.float32):
    layers = []
    dims = list(zip(hidden_units[:-1], hidden_units[1:])) + [
        (hidden_units[-1], output_dim)]
    for (in_dim, out_dim) in dims:
        key, sub = jax.random.split(key)
        std = (2.0 / (in_dim + out_dim)) ** 0.5          # xavier_normal_
        w = std * jax.random.normal(sub, (in_dim, out_dim), dtype)
        b = jnp.zeros((out_dim,), dtype)                 # bias.data.zero_()
        layers.append((w, b))
    return {"layers": layers, "in_dim": hidden_units[0], "out_dim": output_dim}


def prepare_padded(params, compute_dtype=jnp.float32):
    """Pad + cast parameters ONCE (not per forward call).

    * layer-0 contraction dim padded only to the sublane pack so x can be
      passed unpadded when its feature dim already matches;
    * every output (lane) dim padded to 128 -> lane-dense MXU tiles;
    * hidden-layer contraction dims padded to 128 (previous activation width);
    * all biases concatenated into one (L, max_kout_p) f32 array (single DMA).
    """
    layers = params["layers"]
    cdt = jnp.dtype(compute_dtype)
    pack = _sublane_pack(cdt)

    weights = []
    for li, (w, _) in enumerate(layers):
        kin, kout = w.shape
        kin_p = _round_up(kin, pack) if li == 0 else _round_up(kin, _LANE)
        kout_p = _round_up(kout, _LANE)
        w_pad = jnp.zeros((kin_p, kout_p), cdt).at[:kin, :kout].set(w.astype(cdt))
        weights.append(w_pad)

    max_kout_p = max(w.shape[1] for w in weights)
    biases = jnp.zeros((len(layers), max_kout_p), jnp.float32)
    for li, (_, b) in enumerate(layers):
        biases = biases.at[li, : b.shape[0]].set(b.astype(jnp.float32))

    return {"weights": weights, "biases": biases,
            "in_dim": params["in_dim"], "out_dim": params["out_dim"],
            "compute_dtype": cdt}


# ----------------------------------------------------------------------------
# Fused forward: one pallas_call for the whole network.
# ----------------------------------------------------------------------------
def dnn_forward(padded, x, *, block_m=128, num_cores=None):
    weights = padded["weights"]
    biases = padded["biases"]
    in_dim, out_dim = padded["in_dim"], padded["out_dim"]
    cdt = padded["compute_dtype"]
    pack = _sublane_pack(cdt)

    M, K = x.shape
    assert K == in_dim, f"expected {in_dim} input features, got {K}"
    kin0_p = weights[0].shape[0]

    if num_cores is None:
        num_cores = _detect_num_tensorcores()

    # Batch tile: single-core parts (v5e/v6e) want the fewest grid steps
    # (~0.35us each in a launch-bound kernel); a 2-TC part (v7x) wants >= 2
    # "parallel" steps so both cores get work.
    bm = min(block_m, max(_round_up(pl.cdiv(M, max(num_cores, 1)), pack), pack))
    Mp = _round_up(M, bm)

    # Pass x through untouched when shape/dtype already match (f32 path at the
    # default config); otherwise pad. Padded batch rows compute bias-only
    # garbage that is sliced away below — correct but wasted work.
    x_c = x.astype(cdt)
    if x_c.shape != (Mp, kin0_p):
        x_c = jnp.zeros((Mp, kin0_p), cdt).at[:M, :K].set(x_c)

    in_specs = [pl.BlockSpec((bm, kin0_p), lambda i: (i, 0))]
    flops = 0
    weight_bytes = 0
    for w in weights:
        kin_p, kout_p = w.shape
        in_specs.append(pl.BlockSpec((kin_p, kout_p), lambda i: (0, 0)))
        flops += 2 * Mp * kin_p * kout_p
        weight_bytes += w.size * w.dtype.itemsize
    bias_bytes = biases.size * biases.dtype.itemsize
    in_specs.append(pl.BlockSpec(biases.shape, lambda i: (0, 0)))

    out_specs = pl.BlockSpec((bm, out_dim), lambda i: (i, 0))

    # VMEM guard: all weights stay resident across the grid; conservatively
    # count two copies of everything. The current config uses <1 MiB, but the
    # all-resident scheme scales with hidden_units^2 and hits v7x's 64 MiB
    # (32 MiB default scoped) VMEM first.
    itemsize = cdt.itemsize
    per_step = bm * kin0_p * itemsize + bm * out_dim * 4
    vmem_est = 2 * (weight_bytes + bias_bytes) + 2 * per_step + (2 << 20)
    assert vmem_est < (24 << 20), "weights too large for all-resident scheme"
    # TODO(synk): K-tile the weights over a second grid axis if the assert fires.
    vmem_limit = int(min(max(vmem_est, 32 << 20), 64 << 20))

    bytes_accessed = int(x_c.size * itemsize + weight_bytes + bias_bytes
                         + Mp * out_dim * 4)

    out = pl.pallas_call(
        _fused_mlp_kernel,
        out_shape=jax.ShapeDtypeStruct((Mp, out_dim), jnp.float32),
        grid=(Mp // bm,),
        in_specs=in_specs,
        out_specs=out_specs,
        compiler_params=pltpu.CompilerParams(
            dimension_semantics=("parallel",),
            vmem_limit_bytes=vmem_limit),
        cost_estimate=pl.CostEstimate(
            flops=flops, transcendentals=0, bytes_accessed=bytes_accessed),
    )(x_c, *weights, biases)

    return out[:M]


# ----------------------------------------------------------------------------
# Pure-JAX reference (unpadded math) for correctness check
# ----------------------------------------------------------------------------
def dnn_forward_ref(params, x):
    layers = params["layers"]
    for (w, b) in layers[:-1]:
        x = jnp.maximum(x @ w + b, 0.0)
    w_out, b_out = layers[-1]
    return x @ w_out + b_out


if __name__ == "__main__":
    hidden_units = [32, 64, 32]   # hidden_units[0] is the input feature dim
    output_dim = 4
    batch = 8

    key = jax.random.PRNGKey(0)
    key, pkey, xkey = jax.random.split(key, 3)

    params = init_dnn_params(pkey, hidden_units, output_dim)
    x = jax.random.normal(xkey, (batch, hidden_units[0]), jnp.float32)
    ref = dnn_forward_ref(params, x)

    # f32 path (exact vs reference; x is passed without any padding copy)
    padded_f32 = prepare_padded(params, jnp.float32)
    out = jax.block_until_ready(dnn_forward(padded_f32, x))
    assert out.shape == (batch, output_dim)
    assert jnp.allclose(out, ref, atol=1e-5, rtol=1e-5), "f32 mismatch vs reference"

    # bf16 compute path (f32 accumulation, 16-row batch pack) — loose tolerance
    padded_bf16 = prepare_padded(params, jnp.bfloat16)
    out_bf16 = jax.block_until_ready(dnn_forward(padded_bf16, x))
    assert out_bf16.shape == (batch, output_dim)
    assert jnp.allclose(out_bf16.astype(jnp.float32), ref, atol=2e-2, rtol=2e-2), \
        "bf16 mismatch vs reference"

    print("KERNEL_OK")
</pallas_src>

<mosaic_0001>
module attributes {stable_mosaic.version = 11 : i64} {
  func.func @_fused_mlp_kernel(%arg0: i32, %arg1: memref<8x32xf32, #tpu.memory_space<vmem>>, %arg2: memref<32x128xf32, #tpu.memory_space<vmem>>, %arg3: memref<128x128xf32, #tpu.memory_space<vmem>>, %arg4: memref<128x128xf32, #tpu.memory_space<vmem>>, %arg5: memref<3x128xf32, #tpu.memory_space<vmem>>, %arg6: memref<8x4xf32, #tpu.memory_space<vmem>>) attributes {dimension_semantics = [#tpu.dimension_semantics<parallel>], iteration_bounds = array<i64: 1>, scalar_prefetch = 0 : i64, scratch_operands = 0 : i64, tpu.core_type = #tpu.core_type<tc>, window_params = [{transform_indices = @transform_0, window_bounds = array<i64: 8, 32>}, {pipeline_mode = #tpu.pipeline_mode<synchronous>, transform_indices = @transform_1, window_bounds = array<i64: 32, 128>}, {pipeline_mode = #tpu.pipeline_mode<synchronous>, transform_indices = @transform_2, window_bounds = array<i64: 128, 128>}, {pipeline_mode = #tpu.pipeline_mode<synchronous>, transform_indices = @transform_3, window_bounds = array<i64: 128, 128>}, {pipeline_mode = #tpu.pipeline_mode<synchronous>, transform_indices = @transform_4, window_bounds = array<i64: 3, 128>}, {transform_indices = @transform_5, window_bounds = array<i64: 8, 4>}]} {
    %c0 = arith.constant 0 : index
    %c0_0 = arith.constant 0 : index
    %0 = vector.load %arg1[%c0, %c0_0] : memref<8x32xf32, #tpu.memory_space<vmem>>, vector<8x32xf32>
    %c0_1 = arith.constant 0 : index
    %c0_2 = arith.constant 0 : index
    %1 = vector.load %arg2[%c0_1, %c0_2] : memref<32x128xf32, #tpu.memory_space<vmem>>, vector<32x128xf32>
    %c0_3 = arith.constant 0 : index
    %c0_4 = arith.constant 0 : index
    %2 = vector.load %arg5[%c0_3, %c0_4] : memref<3x128xf32, #tpu.memory_space<vmem>>, vector<1x128xf32>
    %3 = vector.shape_cast %2 : vector<1x128xf32> to vector<128xf32>
    %cst = arith.constant dense<0.000000e+00> : vector<8x128xf32>
    %4 = tpu.matmul %0, %1, %cst {dimension_numbers = #tpu.dot_dimension_numbers<[1], [0], [0], [1], [0, 0, 1, 1], [], []>} : vector<8x32xf32>, vector<32x128xf32>, vector<8x128xf32> -> vector<8x128xf32>
    %5 = vector.shape_cast %3 : vector<128xf32> to vector<1x128xf32>
    %6 = vector.broadcast %5 : vector<1x128xf32> to vector<8x128xf32>
    %7 = arith.addf %4, %6 : vector<8x128xf32>
    %cst_5 = arith.constant 0.000000e+00 : f32
    %8 = vector.broadcast %cst_5 : f32 to vector<8x128xf32>
    %9 = arith.maximumf %7, %8 : vector<8x128xf32>
    %c0_6 = arith.constant 0 : index
    %c0_7 = arith.constant 0 : index
    %10 = vector.load %arg3[%c0_6, %c0_7] : memref<128x128xf32, #tpu.memory_space<vmem>>, vector<128x128xf32>
    %c1 = arith.constant 1 : index
    %c0_8 = arith.constant 0 : index
    %11 = vector.load %arg5[%c1, %c0_8] : memref<3x128xf32, #tpu.memory_space<vmem>>, vector<1x128xf32>
    %12 = vector.shape_cast %11 : vector<1x128xf32> to vector<128xf32>
    %cst_9 = arith.constant dense<0.000000e+00> : vector<8x128xf32>
    %13 = tpu.matmul %9, %10, %cst_9 {dimension_numbers = #tpu.dot_dimension_numbers<[1], [0], [0], [1], [0, 0, 1, 1], [], []>} : vector<8x128xf32>, vector<128x128xf32>, vector<8x128xf32> -> vector<8x128xf32>
    %14 = vector.shape_cast %12 : vector<128xf32> to vector<1x128xf32>
    %15 = vector.broadcast %14 : vector<1x128xf32> to vector<8x128xf32>
    %16 = arith.addf %13, %15 : vector<8x128xf32>
    %cst_10 = arith.constant 0.000000e+00 : f32
    %17 = vector.broadcast %cst_10 : f32 to vector<8x128xf32>
    %18 = arith.maximumf %16, %17 : vector<8x128xf32>
    %c0_11 = arith.constant 0 : index
    %c0_12 = arith.constant 0 : index
    %19 = vector.load %arg4[%c0_11, %c0_12] : memref<128x128xf32, #tpu.memory_space<vmem>>, vector<128x128xf32>
    %c2 = arith.constant 2 : index
    %c0_13 = arith.constant 0 : index
    %20 = vector.load %arg5[%c2, %c0_13] : memref<3x128xf32, #tpu.memory_space<vmem>>, vector<1x128xf32>
    %21 = vector.shape_cast %20 : vector<1x128xf32> to vector<128xf32>
    %cst_14 = arith.constant dense<0.000000e+00> : vector<8x128xf32>
    %22 = tpu.matmul %18, %19, %cst_14 {dimension_numbers = #tpu.dot_dimension_numbers<[1], [0], [0], [1], [0, 0, 1, 1], [], []>} : vector<8x128xf32>, vector<128x128xf32>, vector<8x128xf32> -> vector<8x128xf32>
    %23 = vector.shape_cast %21 : vector<128xf32> to vector<1x128xf32>
    %24 = vector.broadcast %23 : vector<1x128xf32> to vector<8x128xf32>
    %25 = arith.addf %22, %24 : vector<8x128xf32>
    %26 = vector.extract_strided_slice %25 {offsets = [0, 0], sizes = [8, 4], strides = [1, 1]} : vector<8x128xf32> to vector<8x4xf32>
    %c0_15 = arith.constant 0 : index
    %c0_16 = arith.constant 0 : index
    %27 = vector.load %arg6[%c0_15, %c0_16] : memref<8x4xf32, #tpu.memory_space<vmem>>, vector<8x4xf32>
    tpu.vector_store %arg6[%c0_15, %c0_16], %26 {strides = array<i32>} : memref<8x4xf32, #tpu.memory_space<vmem>>, vector<8x4xf32>,
    return
  }
  func.func @transform_0(%arg0: i32) -> (i32, i32) {
    %c0_i32 = arith.constant 0 : i32
    %c0_i32_0 = arith.constant 0 : i32
    return %arg0, %c0_i32 : i32, i32
  }
  func.func @transform_1(%arg0: i32) -> (i32, i32) {
    %c0_i32 = arith.constant 0 : i32
    %c0_i32_0 = arith.constant 0 : i32
    %c0_i32_1 = arith.constant 0 : i32
    return %c0_i32, %c0_i32_0 : i32, i32
  }
  func.func @transform_2(%arg0: i32) -> (i32, i32) {
    %c0_i32 = arith.constant 0 : i32
    %c0_i32_0 = arith.constant 0 : i32
    %c0_i32_1 = arith.constant 0 : i32
    return %c0_i32, %c0_i32_0 : i32, i32
  }
  func.func @transform_3(%arg0: i32) -> (i32, i32) {
    %c0_i32 = arith.constant 0 : i32
    %c0_i32_0 = arith.constant 0 : i32
    %c0_i32_1 = arith.constant 0 : i32
    return %c0_i32, %c0_i32_0 : i32, i32
  }
  func.func @transform_4(%arg0: i32) -> (i32, i32) {
    %c0_i32 = arith.constant 0 : i32
    %c0_i32_0 = arith.constant 0 : i32
    %c0_i32_1 = arith.constant 0 : i32
    return %c0_i32, %c0_i32_0 : i32, i32
  }
  func.func @transform_5(%arg0: i32) -> (i32, i32) {
    %c0_i32 = arith.constant 0 : i32
    %c0_i32_0 = arith.constant 0 : i32
    return %arg0, %c0_i32 : i32, i32
  }
}

</mosaic_0001>

<llo_original>
// kernel: tpu_custom_call.1
$region0: #{tpu_custom_call.1}
  #allocation0 [shape = 'u32[]', space=smem, size = 0x4, offset = 0x4, fixed_abs, tag = 'smem constant byte address 0x4 - core index']
  #allocation1 [shape = 'u32[144,128]{1,0:T(1,128)}', space=vmem, size = 0x12000, scoped, tag = 'internal scratch']
  %s0 = inlined_call_operand.hbm [shape: f32[8,32], index: 0, kind: input, shape index: {}]
  %s1 = inlined_call_operand.hbm [shape: f32[32,128], index: 1, kind: input, shape index: {}]
  %s2 = inlined_call_operand.hbm [shape: f32[128,128], index: 2, kind: input, shape index: {}]
  %s3 = inlined_call_operand.hbm [shape: f32[128,128], index: 3, kind: input, shape index: {}]
  %s4 = inlined_call_operand.vmem [shape: f32[3,128], index: 4, kind: input, shape index: {}]
  %s5 = inlined_call_operand.vmem [shape: f32[8,4], index: 5, kind: output, shape index: {}]
  %s6 = sld [smem:[#allocation0]]
  $region46: #{tpu_custom_call.1} parent=0
    _
  %s8 = ssub.s32 1, %s6
  %s9 = scalar_select 0, %s8, %s6
  $region1: #{tpu_custom_call.1} parent=0
    #allocation2 [shape = 'u8[4096]{0}', space=vmem, size = 0x1000, scoped, tag = 'input window, operand 0, single buffered']
    #allocation3 [shape = 's32[1]{0}', space=sflag, size = 0x4, scoped, tag = 'scoped memory for tpu_custom_call.1']
    #allocation4 [shape = 'u8[16384]{0}', space=vmem, size = 0x4000, scoped, tag = 'input window, operand 1, single buffered']
    #allocation5 [shape = 's32[1]{0}', space=sflag, size = 0x4, scoped, tag = 'scoped memory for tpu_custom_call.1']
    #allocation6 [shape = 'u8[65536]{0}', space=vmem, size = 0x10000, scoped, tag = 'input window, operand 2, single buffered']
    #allocation7 [shape = 'u8[65536]{0}', space=vmem, size = 0x10000, scoped, tag = 'input window, operand 3, single buffered']
    #allocation8 [shape = 's32[1]{0}', space=sflag, size = 0x4, scoped, tag = 'scoped memory for tpu_custom_call.1']
    %10 = vsyncpa [#allocation3], 0
    %11 = vsyncpa [#allocation5], 0
    %12 = vsyncpa [#allocation8], 0
    // Predicated region
    $region2: #{tpu_custom_call.1} parent=1 // pred_check
      _
    $region3: #{tpu_custom_call.1} parent=1 // pred_check_branch
      %14 = sbr.rel (0) target = $region5
    $region4: #{tpu_custom_call.1} parent=1 // pred_region
      %s16 = ssub.s32 128, 128
      %17 = vsyncadd [#allocation3], %s16
      %s19 = sshll.u32 [#allocation2], 4
      %s20 = int_to_ptr.vmem [resolvable:$true] %s19
      %22 = dma.hbm_to_vmem [thread:$0]  %s0, 128, %s20, [#allocation3]
    $region5: #{tpu_custom_call.1} parent=1 // pred_fallthru
      _
    // Predicated region
    $region6: #{tpu_custom_call.1} parent=1 // pred_check
      _
    $region7: #{tpu_custom_call.1} parent=1 // pred_check_branch
      %24 = sbr.rel (0) target = $region9
    $region8: #{tpu_custom_call.1} parent=1 // pred_region
      %s26 = ssub.s32 512, 512
      %27 = vsyncadd [#allocation5], %s26
      %s28 = sshll.u32 [#allocation4], 4
      %s29 = int_to_ptr.vmem [resolvable:$true] %s28
      %34 = dma.hbm_to_vmem [thread:$0]  %s1, 512, %s29, [#allocation5], 128, 128, 8
    $region9: #{tpu_custom_call.1} parent=1 // pred_fallthru
      _
    // Predicated region
    $region10: #{tpu_custom_call.1} parent=1 // pred_check
      _
    $region11: #{tpu_custom_call.1} parent=1 // pred_check_branch
      %36 = sbr.rel (0) target = $region13
    $region12: #{tpu_custom_call.1} parent=1 // pred_region
      %s38 = ssub.s32 2048, 2048
      %39 = vsyncadd [#allocation5], %s38
      %s40 = sshll.u32 [#allocation6], 4
      %s41 = int_to_ptr.vmem [resolvable:$true] %s40
      %46 = dma.hbm_to_vmem [thread:$0]  %s2, 2048, %s41, [#allocation5], 128, 128, 8
    $region13: #{tpu_custom_call.1} parent=1 // pred_fallthru
      _
    // Predicated region
    $region14: #{tpu_custom_call.1} parent=1 // pred_check
      _
    $region15: #{tpu_custom_call.1} parent=1 // pred_check_branch
      %48 = sbr.rel (0) target = $region17
    $region16: #{tpu_custom_call.1} parent=1 // pred_region
      %s50 = ssub.s32 2048, 2048
      %51 = vsyncadd [#allocation8], %s50
      %s52 = sshll.u32 [#allocation7], 4
      %s53 = int_to_ptr.vmem [resolvable:$true] %s52
      %58 = dma.hbm_to_vmem [thread:$0]  %s3, 2048, %s53, [#allocation8], 128, 128, 8
    $region17: #{tpu_custom_call.1} parent=1 // pred_fallthru
      _
    // Predicated region
    $region18: #{tpu_custom_call.1} parent=1 // pred_check
      _
    $region19: #{tpu_custom_call.1} parent=1 // pred_check_branch
      %60 = sbr.rel (0) target = $region21
    $region20: #{tpu_custom_call.1} parent=1 // pred_region
      _
    $region21: #{tpu_custom_call.1} parent=1 // pred_fallthru
      _
    // Predicated region
    $region22: #{tpu_custom_call.1} parent=1 // pred_check
      _
    $region23: #{tpu_custom_call.1} parent=1 // pred_check_branch
      %62 = sbr.rel (0) target = $region25
    $region24: #{tpu_custom_call.1} parent=1 // pred_region
      %63 = dma.done [#allocation3], 128
    $region25: #{tpu_custom_call.1} parent=1 // pred_fallthru
      _
    // Predicated region
    $region26: #{tpu_custom_call.1} parent=1 // pred_check
      _
    $region27: #{tpu_custom_call.1} parent=1 // pred_check_branch
      %65 = sbr.rel (0) target = $region29
    $region28: #{tpu_custom_call.1} parent=1 // pred_region
      %66 = dma.done [#allocation5], 512
    $region29: #{tpu_custom_call.1} parent=1 // pred_fallthru
      _
    // Predicated region
    $region30: #{tpu_custom_call.1} parent=1 // pred_check
      _
    $region31: #{tpu_custom_call.1} parent=1 // pred_check_branch
      %68 = sbr.rel (0) target = $region33
    $region32: #{tpu_custom_call.1} parent=1 // pred_region
      %69 = dma.done [#allocation5], 2048
    $region33: #{tpu_custom_call.1} parent=1 // pred_fallthru
      _
    // Predicated region
    $region34: #{tpu_custom_call.1} parent=1 // pred_check
      _
    $region35: #{tpu_custom_call.1} parent=1 // pred_check_branch
      %71 = sbr.rel (0) target = $region37
    $region36: #{tpu_custom_call.1} parent=1 // pred_region
      %72 = dma.done [#allocation8], 2048
    $region37: #{tpu_custom_call.1} parent=1 // pred_fallthru
      _
    %v73 = vld [vmem:[#allocation2] sm:$0xff]
    %v74 = vld [vmem:[#allocation4] sm:$0xff]
    %v75 = vld [vmem:[#allocation4 + $0x8] sm:$0xff]
    %v76 = vld [vmem:[#allocation4 + $0x10] sm:$0xff]
    %v77 = vld [vmem:[#allocation4 + $0x18] sm:$0xff]
    %v78 = vld [vmem:[%s4] sm:$0x1]
    %v79 = vlaneseq
    %v80 = vshrl.u32 %v79, 7
    %v81 = vsub.s32 0, %v80
    %v82 = vrot.slane %v78, %v81
    %vm83 = vcmask 261120
    %v85 = vsel %vm83, %v73, 0
    %87 = vmatprep.subr.mxu0 0.0
    %88 = vmatpush1.msra.mxu0 0.0
    %89 = vmatprep.subr.mxu0 0.0
    %90 = vmatpush1.msra.mxu0 0.0
    %91 = vmatprep.subr.mxu0 0.0
    %92 = vmatpush1.msra.mxu0 0.0
    %93 = vmatprep.subr.mxu0 0.0
    %94 = vmatpush1.msra.mxu0 0.0
    %95 = vmatprep.subr.mxu0 0.0
    %96 = vmatpush1.msra.mxu0 0.0
    %97 = vmatprep.subr.mxu0 0.0
    %98 = vmatpush1.msra.mxu0 0.0
    %99 = vmatprep.subr.mxu0 0.0
    %100 = vmatpush1.msra.mxu0 0.0
    %101 = vmatprep.subr.mxu0 0.0
    %102 = vmatpush1.msra.mxu0 0.0
    %103 = vmatprep.subr.mxu0 0.0
    %104 = vmatpush1.msra.mxu0 0.0
    %105 = vmatprep.subr.mxu0 0.0
    %106 = vmatpush1.msra.mxu0 0.0
    %107 = vmatprep.subr.mxu0 0.0
    %108 = vmatpush1.msra.mxu0 0.0
    %109 = vmatprep.subr.mxu0 0.0
    %110 = vmatpush1.msra.mxu0 0.0
    %111 = vmatprep.subr.mxu0 0.0
    %112 = vmatpush1.msra.mxu0 %v77
    %113 = vmatprep.subr.mxu0 0.0
    %114 = vmatpush1.msra.mxu0 %v76
    %115 = vmatprep.subr.mxu0 0.0
    %116 = vmatpush1.msra.mxu0 %v75
    %117 = vmatprep.subr.mxu0 0.0
    %118 = vmatpush1.msra.mxu0 %v74
    %119 = vmatprep.subr.mxu0 0.0
    %120 = vmatpush2.msra.mxu0 0.0
    %121 = vmatprep.subr.mxu0 0.0
    %122 = vmatpush2.msra.mxu0 0.0
    %123 = vmatprep.subr.mxu0 0.0
    %124 = vmatpush2.msra.mxu0 0.0
    %125 = vmatprep.subr.mxu0 0.0
    %126 = vmatpush2.msra.mxu0 0.0
    %127 = vmatprep.subr.mxu0 0.0
    %128 = vmatpush2.msra.mxu0 0.0
    %129 = vmatprep.subr.mxu0 0.0
    %130 = vmatpush2.msra.mxu0 0.0
    %131 = vmatprep.subr.mxu0 0.0
    %132 = vmatpush2.msra.mxu0 0.0
    %133 = vmatprep.subr.mxu0 0.0
    %134 = vmatpush2.msra.mxu0 0.0
    %135 = vmatprep.subr.mxu0 0.0
    %136 = vmatpush2.msra.mxu0 0.0
    %137 = vmatprep.subr.mxu0 0.0
    %138 = vmatpush2.msra.mxu0 0.0
    %139 = vmatprep.subr.mxu0 0.0
    %140 = vmatpush2.msra.mxu0 0.0
    %141 = vmatprep.subr.mxu0 0.0
    %142 = vmatpush2.msra.mxu0 0.0
    %143 = vmatprep.subr.mxu0 0.0
    %144 = vmatpush2.msra.mxu0 0.0
    %145 = vmatprep.subr.mxu0 0.0
    %146 = vmatpush2.msra.mxu0 0.0
    %147 = vmatprep.subr.mxu0 0.0
    %148 = vmatpush2.msra.mxu0 0.0
    %149 = vmatprep.subr.mxu0 0.0
    %150 = vmatpush2.msra.mxu0 0.0
    %151 = vmatprep.mubr.f32.mxu0 0.0
    %152 = vmatmul.mubr.f32.gmra.mxu0 %v85
    %v153 = vpop.f32.mrf.mxu0
    %v154 = vadd.f32 %v82, %v153
    %v155 = vpop.f32.mrf.mxu0
    %156 = vdwg.mxu0
    %v157 = vmax.f32 %v154, 0.0
    %v158 = vld [vmem:[#allocation6] sm:$0xff]
    %v159 = vld [vmem:[#allocation6 + $0x8] sm:$0xff]
    %v160 = vld [vmem:[#allocation6 + $0x10] sm:$0xff]
    %v161 = vld [vmem:[#allocation6 + $0x18] sm:$0xff]
    %v162 = vld [vmem:[#allocation6 + $0x20] sm:$0xff]
    %v163 = vld [vmem:[#allocation6 + $0x28] sm:$0xff]
    %v164 = vld [vmem:[#allocation6 + $0x30] sm:$0xff]
    %v165 = vld [vmem:[#allocation6 + $0x38] sm:$0xff]
    %v166 = vld [vmem:[#allocation6 + $0x40] sm:$0xff]
    %v167 = vld [vmem:[#allocation6 + $0x48] sm:$0xff]
    %v168 = vld [vmem:[#allocation6 + $0x50] sm:$0xff]
    %v169 = vld [vmem:[#allocation6 + $0x58] sm:$0xff]
    %v170 = vld [vmem:[#allocation6 + $0x60] sm:$0xff]
    %v171 = vld [vmem:[#allocation6 + $0x68] sm:$0xff]
    %v172 = vld [vmem:[#allocation6 + $0x70] sm:$0xff]
    %v173 = vld [vmem:[#allocation6 + $0x78] sm:$0xff]
    %v174 = vld [vmem:[%s4 + $0x1] sm:$0x1]
    %v175 = vlaneseq
    %v176 = vshrl.u32 %v175, 7
    %v177 = vsub.s32 0, %v176
    %v178 = vrot.slane %v174, %v177
    %179 = vmatprep.subr.mxu0 0.0
    %180 = vmatpush1.msra.mxu0 %v173
    %181 = vmatprep.subr.mxu0 0.0
    %182 = vmatpush1.msra.mxu0 %v172
    %183 = vmatprep.subr.mxu0 0.0
    %184 = vmatpush1.msra.mxu0 %v171
    %185 = vmatprep.subr.mxu0 0.0
    %186 = vmatpush1.msra.mxu0 %v170
    %187 = vmatprep.subr.mxu0 0.0
    %188 = vmatpush1.msra.mxu0 %v169
    %189 = vmatprep.subr.mxu0 0.0
    %190 = vmatpush1.msra.mxu0 %v168
    %191 = vmatprep.subr.mxu0 0.0
    %192 = vmatpush1.msra.mxu0 %v167
    %193 = vmatprep.subr.mxu0 0.0
    %194 = vmatpush1.msra.mxu0 %v166
    %195 = vmatprep.subr.mxu0 0.0
    %196 = vmatpush1.msra.mxu0 %v165
    %197 = vmatprep.subr.mxu0 0.0
    %198 = vmatpush1.msra.mxu0 %v164
    %199 = vmatprep.subr.mxu0 0.0
    %200 = vmatpush1.msra.mxu0 %v163
    %201 = vmatprep.subr.mxu0 0.0
    %202 = vmatpush1.msra.mxu0 %v162
    %203 = vmatprep.subr.mxu0 0.0
    %204 = vmatpush1.msra.mxu0 %v161
    %205 = vmatprep.subr.mxu0 0.0
    %206 = vmatpush1.msra.mxu0 %v160
    %207 = vmatprep.subr.mxu0 0.0
    %208 = vmatpush1.msra.mxu0 %v159
    %209 = vmatprep.subr.mxu0 0.0
    %210 = vmatpush1.msra.mxu0 %v158
    %211 = vmatprep.subr.mxu0 0.0
    %212 = vmatpush2.msra.mxu0 0.0
    %213 = vmatprep.subr.mxu0 0.0
    %214 = vmatpush2.msra.mxu0 0.0
    %215 = vmatprep.subr.mxu0 0.0
    %216 = vmatpush2.msra.mxu0 0.0
    %217 = vmatprep.subr.mxu0 0.0
    %218 = vmatpush2.msra.mxu0 0.0
    %219 = vmatprep.subr.mxu0 0.0
    %220 = vmatpush2.msra.mxu0 0.0
    %221 = vmatprep.subr.mxu0 0.0
    %222 = vmatpush2.msra.mxu0 0.0
    %223 = vmatprep.subr.mxu0 0.0
    %224 = vmatpush2.msra.mxu0 0.0
    %225 = vmatprep.subr.mxu0 0.0
    %226 = vmatpush2.msra.mxu0 0.0
    %227 = vmatprep.subr.mxu0 0.0
    %228 = vmatpush2.msra.mxu0 0.0
    %229 = vmatprep.subr.mxu0 0.0
    %230 = vmatpush2.msra.mxu0 0.0
    %231 = vmatprep.subr.mxu0 0.0
    %232 = vmatpush2.msra.mxu0 0.0
    %233 = vmatprep.subr.mxu0 0.0
    %234 = vmatpush2.msra.mxu0 0.0
    %235 = vmatprep.subr.mxu0 0.0
    %236 = vmatpush2.msra.mxu0 0.0
    %237 = vmatprep.subr.mxu0 0.0
    %238 = vmatpush2.msra.mxu0 0.0
    %239 = vmatprep.subr.mxu0 0.0
    %240 = vmatpush2.msra.mxu0 0.0
    %241 = vmatprep.subr.mxu0 0.0
    %242 = vmatpush2.msra.mxu0 0.0
    %243 = vmatprep.mubr.f32.mxu0 0.0
    %244 = vmatmul.mubr.f32.gmra.mxu0 %v157
    %v245 = vpop.f32.mrf.mxu0
    %v246 = vadd.f32 %v178, %v245
    %v247 = vpop.f32.mrf.mxu0
    %248 = vdwg.mxu0
    %v249 = vmax.f32 %v246, 0.0
    %v250 = vld [vmem:[#allocation7] sm:$0xff]
    %v251 = vld [vmem:[#allocation7 + $0x8] sm:$0xff]
    %v252 = vld [vmem:[#allocation7 + $0x10] sm:$0xff]
    %v253 = vld [vmem:[#allocation7 + $0x18] sm:$0xff]
    %v254 = vld [vmem:[#allocation7 + $0x20] sm:$0xff]
    %v255 = vld [vmem:[#allocation7 + $0x28] sm:$0xff]
    %v256 = vld [vmem:[#allocation7 + $0x30] sm:$0xff]
    %v257 = vld [vmem:[#allocation7 + $0x38] sm:$0xff]
    %v258 = vld [vmem:[#allocation7 + $0x40] sm:$0xff]
    %v259 = vld [vmem:[#allocation7 + $0x48] sm:$0xff]
    %v260 = vld [vmem:[#allocation7 + $0x50] sm:$0xff]
    %v261 = vld [vmem:[#allocation7 + $0x58] sm:$0xff]
    %v262 = vld [vmem:[#allocation7 + $0x60] sm:$0xff]
    %v263 = vld [vmem:[#allocation7 + $0x68] sm:$0xff]
    %v264 = vld [vmem:[#allocation7 + $0x70] sm:$0xff]
    %v265 = vld [vmem:[#allocation7 + $0x78] sm:$0xff]
    %v266 = vld [vmem:[%s4 + $0x2] sm:$0x1]
    %v267 = vlaneseq
    %v268 = vshrl.u32 %v267, 7
    %v269 = vsub.s32 0, %v268
    %v270 = vrot.slane %v266, %v269
    %271 = vmatprep.subr.mxu0 0.0
    %272 = vmatpush1.msra.mxu0 %v265
    %273 = vmatprep.subr.mxu0 0.0
    %274 = vmatpush1.msra.mxu0 %v264
    %275 = vmatprep.subr.mxu0 0.0
    %276 = vmatpush1.msra.mxu0 %v263
    %277 = vmatprep.subr.mxu0 0.0
    %278 = vmatpush1.msra.mxu0 %v262
    %279 = vmatprep.subr.mxu0 0.0
    %280 = vmatpush1.msra.mxu0 %v261
    %281 = vmatprep.subr.mxu0 0.0
    %282 = vmatpush1.msra.mxu0 %v260
    %283 = vmatprep.subr.mxu0 0.0
    %284 = vmatpush1.msra.mxu0 %v259
    %285 = vmatprep.subr.mxu0 0.0
    %286 = vmatpush1.msra.mxu0 %v258
    %287 = vmatprep.subr.mxu0 0.0
    %288 = vmatpush1.msra.mxu0 %v257
    %289 = vmatprep.subr.mxu0 0.0
    %290 = vmatpush1.msra.mxu0 %v256
    %291 = vmatprep.subr.mxu0 0.0
    %292 = vmatpush1.msra.mxu0 %v255
    %293 = vmatprep.subr.mxu0 0.0
    %294 = vmatpush1.msra.mxu0 %v254
    %295 = vmatprep.subr.mxu0 0.0
    %296 = vmatpush1.msra.mxu0 %v253
    %297 = vmatprep.subr.mxu0 0.0
    %298 = vmatpush1.msra.mxu0 %v252
    %299 = vmatprep.subr.mxu0 0.0
    %300 = vmatpush1.msra.mxu0 %v251
    %301 = vmatprep.subr.mxu0 0.0
    %302 = vmatpush1.msra.mxu0 %v250
    %303 = vmatprep.subr.mxu0 0.0
    %304 = vmatpush2.msra.mxu0 0.0
    %305 = vmatprep.subr.mxu0 0.0
    %306 = vmatpush2.msra.mxu0 0.0
    %307 = vmatprep.subr.mxu0 0.0
    %308 = vmatpush2.msra.mxu0 0.0
    %309 = vmatprep.subr.mxu0 0.0
    %310 = vmatpush2.msra.mxu0 0.0
    %311 = vmatprep.subr.mxu0 0.0
    %312 = vmatpush2.msra.mxu0 0.0
    %313 = vmatprep.subr.mxu0 0.0
    %314 = vmatpush2.msra.mxu0 0.0
    %315 = vmatprep.subr.mxu0 0.0
    %316 = vmatpush2.msra.mxu0 0.0
    %317 = vmatprep.subr.mxu0 0.0
    %318 = vmatpush2.msra.mxu0 0.0
    %319 = vmatprep.subr.mxu0 0.0
    %320 = vmatpush2.msra.mxu0 0.0
    %321 = vmatprep.subr.mxu0 0.0
    %322 = vmatpush2.msra.mxu0 0.0
    %323 = vmatprep.subr.mxu0 0.0
    %324 = vmatpush2.msra.mxu0 0.0
    %325 = vmatprep.subr.mxu0 0.0
    %326 = vmatpush2.msra.mxu0 0.0
    %327 = vmatprep.subr.mxu0 0.0
    %328 = vmatpush2.msra.mxu0 0.0
    %329 = vmatprep.subr.mxu0 0.0
    %330 = vmatpush2.msra.mxu0 0.0
    %331 = vmatprep.subr.mxu0 0.0
    %332 = vmatpush2.msra.mxu0 0.0
    %333 = vmatprep.subr.mxu0 0.0
    %334 = vmatpush2.msra.mxu0 0.0
    %335 = vmatprep.mubr.f32.mxu0 0.0
    %336 = vmatmul.mubr.f32.gmra.mxu0 %v249
    %v337 = vpop.f32.mrf.mxu0
    %v338 = vadd.f32 %v270, %v337
    %v339 = vpop.f32.mrf.mxu0
    %340 = vdwg.mxu0
    %vm341 = vcmask 31744
    %342 = vst.msk [vmem:[%s5] sm:$0xff] %vm341, %v338
    // Predicated region
    $region38: #{tpu_custom_call.1} parent=1 // pred_check
      _
    $region39: #{tpu_custom_call.1} parent=1 // pred_check_branch
      %344 = sbr.rel (0) target = $region41
    $region40: #{tpu_custom_call.1} parent=1 // pred_region
      _
    $region41: #{tpu_custom_call.1} parent=1 // pred_fallthru
      _
    // Predicated region
    $region42: #{tpu_custom_call.1} parent=1 // pred_check
      _
    $region43: #{tpu_custom_call.1} parent=1 // pred_check_branch
      %346 = sbr.rel (0) target = $region45
    $region44: #{tpu_custom_call.1} parent=1 // pred_region
      _
    $region45: #{tpu_custom_call.1} parent=1 // pred_fallthru
      _
    %347 = vsyncpa [#allocation3], 1
    %348 = vsyncpa [#allocation5], 1
    %349 = vsyncpa [#allocation8], 1

</llo_original>
